<compile_context>
chip_gen: v7x
topology: tpu7x:2x2x1
jax: 0.10.0
libtpu: 0.0.40
codegen_flags: <defaults>
</compile_context>

<pallas_src>
import math

import jax
import jax.numpy as jnp
from jax.experimental import pallas as pl
from jax.experimental.pallas import tpu as pltpu

_LANE = 128
_SUBLANE = 8


def _scale_kernel(s_ref, x_ref, o_ref):
    # s_ref : (1, L)   -- precomputed softmax scores row (same block every step)
    # x_ref : (tm, L)  -- streaming input tile
    # o_ref : (tm, L)  -- output tile
    o_ref[...] = x_ref[...] * s_ref[...].astype(o_ref.dtype)


def attention_module_forward(x, attention_weights, *, target_block_bytes=2 * 1024 * 1024):
    """Returns x * softmax(attention_weights) broadcast along the last dim."""
    orig_shape = x.shape
    D = attention_weights.shape[0]
    assert orig_shape[-1] == D, "last dim of x must equal input_size"

    # Softmax hoisted out of the kernel: one trivial (D,)-sized op, done in f32.
    scores = jax.nn.softmax(attention_weights.astype(jnp.float32), axis=0)

    # Flatten leading dims -> (N, D).  Row-major reshapes here are zero-copy.
    x2 = x.reshape(-1, D)
    N = x2.shape[0]
    total = N * D

    # Lane-dense packing: fold the D-periodic score pattern into a lane width L
    # that is a multiple of 128 so vregs are full and stores are unmasked.
    if D % _LANE == 0:
        L = D
        packed = x2
        scores_row = scores
    else:
        L = (D * _LANE) // math.gcd(D, _LANE)  # lcm(D, 128); L % D == 0
        if total % L == 0 and total >= L:
            packed = x2.reshape(total // L, L)         # zero-copy reshape
            scores_row = jnp.tile(scores, L // D)      # tiny (L,) wrapper op
        else:
            # Fallback: keep full-D lane dim (block last dim == full array dim
            # is legal even when D is not a multiple of 128).
            L = D
            packed = x2
            scores_row = scores

    R = packed.shape[0]
    itemsize = jnp.dtype(packed.dtype).itemsize
    bytes_per_row = L * itemsize

    # Row-tile sized to ~target_block_bytes; multiple of the 8-row sublane
    # granularity (or the full row extent when R is small).
    tm = max(1, target_block_bytes // bytes_per_row)
    if tm >= R:
        tm = R                                         # single block: full extent is legal
    else:
        tm = max(_SUBLANE, (tm // _SUBLANE) * _SUBLANE)

    grid = (pl.cdiv(R, tm),)                           # partial last block handled by Pallas

    out = pl.pallas_call(
        _scale_kernel,
        out_shape=jax.ShapeDtypeStruct((R, L), x.dtype),
        grid_spec=pltpu.PrefetchScalarGridSpec(
            num_scalar_prefetch=0,
            grid=grid,
            in_specs=[
                pl.BlockSpec((1, L), lambda i: (0, 0)),    # resident scores row
                pl.BlockSpec((tm, L), lambda i: (i, 0)),   # streaming x row-tile
            ],
            out_specs=pl.BlockSpec((tm, L), lambda i: (i, 0)),
        ),
        compiler_params=pltpu.CompilerParams(
            dimension_semantics=("parallel",),             # megacore sharding on v7x
        ),
    )(scores_row.reshape(1, L), packed)

    return out.reshape(orig_shape)


if __name__ == "__main__":
    key = jax.random.PRNGKey(0)
    k_w, k_x = jax.random.split(key)

    # In MetaGNN the attention is applied to the per-graph concatenation of the
    # gnn_steps global vectors: D = u_ind * gnn_steps.  Small demo shapes.
    u_ind, gnn_steps = 8, 4
    D = u_ind * gnn_steps        # 32 (< 128 lanes -> exercises the lane-packing path)
    n_graphs = 64                # rows of the concatenated `global_out`

    # torch.rand(input_size)-style uniform [0,1) init for the parameter.
    attention_weights = jax.random.uniform(k_w, (D,), dtype=jnp.float32)
    global_out = jax.random.normal(k_x, (n_graphs, D), dtype=jnp.float32)

    out = attention_module_forward(global_out, attention_weights)
    out = jax.block_until_ready(out)

    # Pure-JAX reference for correctness.
    ref = global_out * jax.nn.softmax(attention_weights, axis=0)
    assert out.shape == global_out.shape
    assert jnp.allclose(out, ref, atol=1e-6, rtol=1e-6), "mismatch vs reference"

    print("KERNEL_OK")
</pallas_src>

<mosaic_0001>
module attributes {stable_mosaic.version = 11 : i64} {
  func.func @_scale_kernel(%arg0: i32, %arg1: memref<1x128xf32, #tpu.memory_space<vmem>>, %arg2: memref<16x128xf32, #tpu.memory_space<vmem>>, %arg3: memref<16x128xf32, #tpu.memory_space<vmem>>) attributes {dimension_semantics = [#tpu.dimension_semantics<parallel>], iteration_bounds = array<i64: 1>, scalar_prefetch = 0 : i64, scratch_operands = 0 : i64, tpu.core_type = #tpu.core_type<tc>, window_params = [{pipeline_mode = #tpu.pipeline_mode<synchronous>, transform_indices = @transform_0, window_bounds = array<i64: 1, 128>}, {transform_indices = @transform_1, window_bounds = array<i64: 16, 128>}, {transform_indices = @transform_2, window_bounds = array<i64: 16, 128>}]} {
    %c0 = arith.constant 0 : index
    %c0_0 = arith.constant 0 : index
    %0 = vector.load %arg2[%c0, %c0_0] : memref<16x128xf32, #tpu.memory_space<vmem>>, vector<16x128xf32>
    %c0_1 = arith.constant 0 : index
    %c0_2 = arith.constant 0 : index
    %1 = vector.load %arg1[%c0_1, %c0_2] : memref<1x128xf32, #tpu.memory_space<vmem>>, vector<1x128xf32>
    %2 = vector.broadcast %1 : vector<1x128xf32> to vector<16x128xf32>
    %3 = arith.mulf %0, %2 : vector<16x128xf32>
    %c0_3 = arith.constant 0 : index
    %c0_4 = arith.constant 0 : index
    %4 = vector.load %arg3[%c0_3, %c0_4] : memref<16x128xf32, #tpu.memory_space<vmem>>, vector<16x128xf32>
    tpu.vector_store %arg3[%c0_3, %c0_4], %3 {strides = array<i32>} : memref<16x128xf32, #tpu.memory_space<vmem>>, vector<16x128xf32>,
    return
  }
  func.func @transform_0(%arg0: i32) -> (i32, i32) {
    %c0_i32 = arith.constant 0 : i32
    %c0_i32_0 = arith.constant 0 : i32
    %c0_i32_1 = arith.constant 0 : i32
    return %c0_i32, %c0_i32_0 : i32, i32
  }
  func.func @transform_1(%arg0: i32) -> (i32, i32) {
    %c0_i32 = arith.constant 0 : i32
    %c0_i32_0 = arith.constant 0 : i32
    return %arg0, %c0_i32 : i32, i32
  }
  func.func @transform_2(%arg0: i32) -> (i32, i32) {
    %c0_i32 = arith.constant 0 : i32
    %c0_i32_0 = arith.constant 0 : i32
    return %arg0, %c0_i32 : i32, i32
  }
}

</mosaic_0001>

<llo_original>
// kernel: tpu_custom_call.1
$region0: #{tpu_custom_call.1}
  #allocation0 [shape = 'u32[]', space=smem, size = 0x4, offset = 0x4, fixed_abs, tag = 'smem constant byte address 0x4 - core index']
  #allocation1 [shape = 'u32[144,128]{1,0:T(1,128)}', space=vmem, size = 0x12000, scoped, tag = 'internal scratch']
  %s0 = inlined_call_operand.hbm [shape: f32[1,128], index: 0, kind: input, shape index: {}]
  %s1 = inlined_call_operand.hbm [shape: f32[16,128], index: 1, kind: input, shape index: {}]
  %s2 = inlined_call_operand.hbm [shape: f32[16,128], index: 2, kind: output, shape index: {}]
  %s3 = sld [smem:[#allocation0]]
  $region26: #{tpu_custom_call.1} parent=0
    _
  %s5 = ssub.s32 1, %s3
  %s6 = scalar_select 0, %s5, %s3
  $region1: #{tpu_custom_call.1} parent=0
    #allocation2 [shape = 'u8[512]{0}', space=vmem, size = 0x400, scoped, tag = 'input window, operand 0, single buffered']
    #allocation3 [shape = 's32[1]{0}', space=sflag, size = 0x4, scoped, tag = 'scoped memory for tpu_custom_call.1']
    #allocation4 [shape = 's32[1]{0}', space=sflag, size = 0x4, scoped, tag = 'scoped memory for tpu_custom_call.1']
    #allocation5 [shape = 'u8[8192]{0}', space=vmem, size = 0x2000, scoped, tag = 'input window, operand 1, single buffered']
    #allocation6 [shape = 's32[1]{0}', space=sflag, size = 0x4, scoped, tag = 'scoped memory for tpu_custom_call.1']
    #allocation7 [shape = 'u8[8192]{0}', space=vmem, size = 0x2000, scoped, tag = 'output window, operand 0, single buffered']
    %7 = vsyncpa [#allocation3], 0
    %8 = vsyncpa [#allocation6], 0
    %9 = vsyncpa [#allocation4], 0
    // Predicated region
    $region2: #{tpu_custom_call.1} parent=1 // pred_check
      _
    $region3: #{tpu_custom_call.1} parent=1 // pred_check_branch
      %11 = sbr.rel (0) target = $region5
    $region4: #{tpu_custom_call.1} parent=1 // pred_region
      %s13 = ssub.s32 16, 16
      %14 = vsyncadd [#allocation3], %s13
      %s16 = sshll.u32 [#allocation2], 4
      %s17 = int_to_ptr.vmem [resolvable:$true] %s16
      %19 = dma.hbm_to_vmem [thread:$0]  %s0, 16, %s17, [#allocation3]
    $region5: #{tpu_custom_call.1} parent=1 // pred_fallthru
      _
    // Predicated region
    $region6: #{tpu_custom_call.1} parent=1 // pred_check
      _
    $region7: #{tpu_custom_call.1} parent=1 // pred_check_branch
      %21 = sbr.rel (0) target = $region9
    $region8: #{tpu_custom_call.1} parent=1 // pred_region
      %s23 = ssub.s32 256, 256
      %24 = vsyncadd [#allocation6], %s23
      %s25 = sshll.u32 [#allocation5], 4
      %s26 = int_to_ptr.vmem [resolvable:$true] %s25
      %31 = dma.hbm_to_vmem [thread:$0]  %s1, 256, %s26, [#allocation6], 128, 128, 8
    $region9: #{tpu_custom_call.1} parent=1 // pred_fallthru
      _
    // Predicated region
    $region10: #{tpu_custom_call.1} parent=1 // pred_check
      _
    $region11: #{tpu_custom_call.1} parent=1 // pred_check_branch
      %33 = sbr.rel (0) target = $region13
    $region12: #{tpu_custom_call.1} parent=1 // pred_region
      %34 = dma.done [#allocation3], 16
    $region13: #{tpu_custom_call.1} parent=1 // pred_fallthru
      _
    // Predicated region
    $region14: #{tpu_custom_call.1} parent=1 // pred_check
      _
    $region15: #{tpu_custom_call.1} parent=1 // pred_check_branch
      %36 = sbr.rel (0) target = $region17
    $region16: #{tpu_custom_call.1} parent=1 // pred_region
      %37 = dma.done [#allocation6], 256
    $region17: #{tpu_custom_call.1} parent=1 // pred_fallthru
      _
    %v38 = vld [vmem:[#allocation5] sm:$0xff]
    %v39 = vld [vmem:[#allocation5 + $0x8] sm:$0xff]
    %v40 = vld [vmem:[#allocation2] sm:$0x1]
    %v42 = vlaneseq
    %v43 = vshrl.u32 %v42, 7
    %v44 = vsub.s32 0, %v43
    %v45 = vrot.slane %v40, %v44
    %v47 = vmul.f32 %v38, %v45
    %v48 = vmul.f32 %v39, %v45
    %49 = vst [vmem:[#allocation7] sm:$0xff] %v47
    %50 = vst [vmem:[#allocation7 + $0x8] sm:$0xff] %v48
    // Predicated region
    $region18: #{tpu_custom_call.1} parent=1 // pred_check
      _
    $region19: #{tpu_custom_call.1} parent=1 // pred_check_branch
      %52 = sbr.rel (0) target = $region21
    $region20: #{tpu_custom_call.1} parent=1 // pred_region
      %s54 = ssub.s32 256, 256
      %55 = vsyncadd [#allocation4], %s54
      %s56 = sshll.u32 [#allocation7], 4
      %s57 = int_to_ptr.vmem [resolvable:$true] %s56
      %62 = dma.vmem_to_hbm [thread:$0]  %s57, 256, %s2, [#allocation4], 128, 128, 8
    $region21: #{tpu_custom_call.1} parent=1 // pred_fallthru
      _
    // Predicated region
    $region22: #{tpu_custom_call.1} parent=1 // pred_check
      _
    $region23: #{tpu_custom_call.1} parent=1 // pred_check_branch
      %64 = sbr.rel (0) target = $region25
    $region24: #{tpu_custom_call.1} parent=1 // pred_region
      %65 = dma.done [#allocation4], 256
    $region25: #{tpu_custom_call.1} parent=1 // pred_fallthru
      _
    %66 = vsyncpa [#allocation3], 1
    %67 = vsyncpa [#allocation6], 1
    %68 = vsyncpa [#allocation4], 1

</llo_original>
